<compile_context>
chip_gen: v7x
topology: tpu7x:2x2x1
jax: 0.10.0
libtpu: 0.0.40
codegen_flags: <defaults>
</compile_context>

<pallas_src>
import jax
import jax.numpy as jnp
from jax.experimental import pallas as pl
from jax.experimental.pallas import tpu as pltpu


# ---------------------------------------------------------------------------
# Kernels
# ---------------------------------------------------------------------------

def ffn_kernel_acc(x_ref, w1_ref, b1_ref, w2_ref, b2_ref, o_ref, acc_ref):
    """Multi-stripe hidden reduction: f32 accumulator resident over the h axis.

    x_ref: (TM, dim) bf16, w1_ref: (dim, TH) bf16, b1_ref: (1, TH) f32,
    w2_ref: (TH, dim) bf16, b2_ref: (1, dim) f32, o_ref: (TM, dim), acc_ref: (TM, dim) f32.
    """
    h_idx = pl.program_id(1)

    @pl.when(h_idx == 0)
    def _():
        acc_ref[...] = jnp.zeros_like(acc_ref)

    # First linear stripe on the MXU (bf16 operands, f32 accumulation),
    # bias add + Swish (x * sigmoid(x)) in f32 on the VPU / EUP.
    pre = jnp.dot(x_ref[...], w1_ref[...], preferred_element_type=jnp.float32)
    pre = pre + b1_ref[...]
    act = pre * jax.nn.sigmoid(pre)

    # Second linear: partial contraction over this hidden stripe into the f32 accumulator.
    acc_ref[...] += jnp.dot(act.astype(jnp.bfloat16), w2_ref[...],
                            preferred_element_type=jnp.float32)

    @pl.when(h_idx == pl.num_programs(1) - 1)
    def _():
        o_ref[...] = (acc_ref[...] + b2_ref[...]).astype(o_ref.dtype)


def ffn_kernel_single(x_ref, w1_ref, b1_ref, w2_ref, b2_ref, o_ref):
    """Single hidden stripe: no accumulator scratch, write output directly."""
    pre = jnp.dot(x_ref[...], w1_ref[...], preferred_element_type=jnp.float32)
    pre = pre + b1_ref[...]
    act = pre * jax.nn.sigmoid(pre)
    out = jnp.dot(act.astype(jnp.bfloat16), w2_ref[...], preferred_element_type=jnp.float32)
    o_ref[...] = (out + b2_ref[...]).astype(o_ref.dtype)


# ---------------------------------------------------------------------------
# Tiling / VMEM heuristics
# ---------------------------------------------------------------------------

def _round_up(n, m):
    return ((n + m - 1) // m) * m


def _vmem_budget():
    """Return (physical_vmem_bytes, scoped_vmem_cap_bytes) for the current TPU generation."""
    phys = 128 << 20
    try:
        info = pltpu.get_tpu_info()
        phys = int(getattr(info, "vmem_capacity_bytes", phys))
    except Exception:
        pass
    if phys <= (64 << 20):
        # v7x: 64 MiB per TC -- never request it all; leave ~16 MiB for internal scratch.
        return phys, min(phys, 48 << 20)
    # v5e / v6e: 128 MiB physical; use ~100 MiB scoped, leave headroom for spills.
    return phys, min(phys - (24 << 20), 100 << 20)


def _vmem_bytes(tile_m, tile_h, dim, out_bytes, weight_bufs=2):
    """Estimate VMEM use including the fused per-stripe intermediates."""
    bf16, f32 = 2, 4
    x_t = 2 * tile_m * dim * bf16              # double-buffered input tile (bf16)
    w1_t = weight_bufs * dim * tile_h * bf16   # buffered W1 stripe
    b1_t = 2 * tile_h * f32
    w2_t = weight_bufs * tile_h * dim * bf16   # buffered W2 stripe
    b2_t = 2 * dim * f32
    out_t = 2 * tile_m * dim * out_bytes       # double-buffered output tile
    acc_t = tile_m * dim * f32                 # accumulator scratch (worst case)
    # Fused intermediates live simultaneously: pre (f32), act (f32), act bf16 copy.
    interm = tile_m * tile_h * (f32 + f32 + bf16)
    return x_t + w1_t + b1_t + w2_t + b2_t + out_t + acc_t + interm


def _choose_tiles(M, dim, hidden, budget, *, out_bytes, want_two_row_tiles):
    """Pick (tile_m, tile_h). tile_m is the primary knob (weight re-streaming),
    tile_h prefers multiples of 512, then 256, then 128."""
    # Hidden-stripe candidates: divisors of hidden that are multiples of 128.
    th_cands = [v for v in range(hidden, 0, -128) if v % 128 == 0 and hidden % v == 0]
    if not th_cands:
        th_cands = [hidden]  # full stripe (legal: block equals full array dims)
    th_cands.sort(key=lambda v: (0 if v % 512 == 0 else (1 if v % 256 == 0 else 2), -v))

    m_ceiling = min(1024, _round_up(max(M, 1), 8))
    if want_two_row_tiles and M > 8:
        # v7x megacore: keep >=2 row tiles so both TensorCores get work.
        m_ceiling = min(m_ceiling, max(8, _round_up(pl.cdiv(M, 2), 8)))
    tm_cands = [t for t in (1024, 768, 512, 256, 128, 64, 32, 16, 8) if t <= m_ceiling]
    if m_ceiling >= 8 and m_ceiling not in tm_cands:
        tm_cands.append(m_ceiling)
    tm_cands = sorted(set(tm_cands), reverse=True) or [8]

    for tm in tm_cands:          # largest row tile first (amortizes weight streams)
        for th in th_cands:      # largest well-shaped hidden stripe that fits
            if _vmem_bytes(tm, th, dim, out_bytes) <= budget:
                return tm, th
    return tm_cands[-1], th_cands[-1]


def _weight_spec(block_shape, index_map, extra_buffer):
    """Weight-stripe BlockSpec, optionally 3-deep buffered (falls back cleanly)."""
    if extra_buffer:
        try:
            return pl.BlockSpec(block_shape, index_map, pipeline_mode=pl.Buffered(3))
        except Exception:
            pass
    return pl.BlockSpec(block_shape, index_map)


# ---------------------------------------------------------------------------
# Wrapper
# ---------------------------------------------------------------------------

def feed_forward(x, w1, b1, w2, b2, *, tile_m=None, tile_h=None, out_dtype=None):
    """x: (B, S, dim); w1: (dim, hidden); b1: (1, hidden); w2: (hidden, dim); b2: (1, dim)."""
    B, S, dim = x.shape
    hidden = w1.shape[1]
    M = B * S

    out_dtype = x.dtype if out_dtype is None else out_dtype
    out_bytes = jnp.dtype(out_dtype).itemsize

    phys_vmem, scoped_cap = _vmem_budget()
    want_two_row_tiles = phys_vmem <= (64 << 20)      # v7x: 2 TCs share the row axis
    budget = int(scoped_cap * 0.85)                   # leave headroom inside the scoped limit

    tm_def, th_def = _choose_tiles(M, dim, hidden, budget,
                                   out_bytes=out_bytes,
                                   want_two_row_tiles=want_two_row_tiles)
    tm = tm_def if tile_m is None else tile_m
    th = th_def if tile_h is None else tile_h
    assert hidden % th == 0, "hidden stripe must divide hidden (reduction padding unsafe)"
    n_h = hidden // th

    # bf16 MXU operands (halves DMA bytes / VMEM); biases and accumulation stay f32.
    x2d = x.reshape(M, dim).astype(jnp.bfloat16)
    w1b = w1.astype(jnp.bfloat16)
    w2b = w2.astype(jnp.bfloat16)
    b1f = b1.reshape(1, hidden).astype(jnp.float32)
    b2f = b2.reshape(1, dim).astype(jnp.float32)

    vmem_limit = int(scoped_cap)
    row_tiles = pl.cdiv(M, tm)

    if n_h == 1:
        # Whole hidden dim in one stripe: skip the accumulator path entirely.
        out2d = pl.pallas_call(
            ffn_kernel_single,
            out_shape=jax.ShapeDtypeStruct((M, dim), out_dtype),
            grid_spec=pltpu.PrefetchScalarGridSpec(
                num_scalar_prefetch=0,
                grid=(row_tiles,),
                in_specs=[
                    pl.BlockSpec((tm, dim), lambda i: (i, 0)),
                    pl.BlockSpec((dim, hidden), lambda i: (0, 0)),
                    pl.BlockSpec((1, hidden), lambda i: (0, 0)),
                    pl.BlockSpec((hidden, dim), lambda i: (0, 0)),
                    pl.BlockSpec((1, dim), lambda i: (0, 0)),
                ],
                out_specs=pl.BlockSpec((tm, dim), lambda i: (i, 0)),
            ),
            compiler_params=pltpu.CompilerParams(
                dimension_semantics=("parallel",),
                vmem_limit_bytes=vmem_limit,
            ),
        )(x2d, w1b, b1f, w2b, b2f)
        return out2d.reshape(B, S, dim)

    # Multi-stripe reduction over hidden: triple-buffer the weight streams only when the
    # stripe is large enough to matter, there is headroom, and we're not on v7x.
    triple_weights = (
        not want_two_row_tiles
        and dim * th * 2 >= (2 << 20)
        and _vmem_bytes(tm, th, dim, out_bytes, weight_bufs=3) <= budget
    )

    grid = (row_tiles, n_h)
    out2d = pl.pallas_call(
        ffn_kernel_acc,
        out_shape=jax.ShapeDtypeStruct((M, dim), out_dtype),
        grid_spec=pltpu.PrefetchScalarGridSpec(
            num_scalar_prefetch=0,
            grid=grid,
            in_specs=[
                pl.BlockSpec((tm, dim), lambda i, h: (i, 0)),      # x rows (resident over h)
                _weight_spec((dim, th), lambda i, h: (0, h), triple_weights),   # W1 stripe
                pl.BlockSpec((1, th), lambda i, h: (0, h)),        # b1 stripe
                _weight_spec((th, dim), lambda i, h: (h, 0), triple_weights),   # W2 stripe
                pl.BlockSpec((1, dim), lambda i, h: (0, 0)),       # b2 (constant)
            ],
            out_specs=pl.BlockSpec((tm, dim), lambda i, h: (i, 0)),  # resident accumulator target
            scratch_shapes=[pltpu.VMEM((tm, dim), jnp.float32)],
        ),
        compiler_params=pltpu.CompilerParams(
            dimension_semantics=("parallel", "arbitrary"),
            vmem_limit_bytes=vmem_limit,
        ),
    )(x2d, w1b, b1f, w2b, b2f)

    return out2d.reshape(B, S, dim)


def feed_forward_ref(x, w1, b1, w2, b2):
    h = jnp.einsum("bsd,dh->bsh", x, w1) + b1[0]
    h = h * jax.nn.sigmoid(h)
    return jnp.einsum("bsh,hd->bsd", h, w2) + b2[0]


if __name__ == "__main__":
    # Lane-dense small test: dim multiple of 128, hidden multiple of 128.
    B, S, dim, mult = 2, 32, 128, 4
    hidden = dim * mult

    key = jax.random.PRNGKey(0)
    kx, k1, k2, k3, k4 = jax.random.split(key, 5)

    x = jax.random.normal(kx, (B, S, dim), dtype=jnp.float32)
    # Deterministic param init (PyTorch Linear-ish uniform bounds).
    bound1 = 1.0 / (dim ** 0.5)
    bound2 = 1.0 / (hidden ** 0.5)
    w1 = jax.random.uniform(k1, (dim, hidden), jnp.float32, -bound1, bound1)
    b1 = jax.random.uniform(k2, (1, hidden), jnp.float32, -bound1, bound1)
    w2 = jax.random.uniform(k3, (hidden, dim), jnp.float32, -bound2, bound2)
    b2 = jax.random.uniform(k4, (1, dim), jnp.float32, -bound2, bound2)

    ref = feed_forward_ref(x, w1, b1, w2, b2)

    # 1) Auto-tiled path: at this size the whole hidden dim fits in one stripe, so the
    #    scratch-free single-stripe kernel is exercised.
    out_auto = jax.block_until_ready(feed_forward(x, w1, b1, w2, b2))
    assert out_auto.shape == (B, S, dim)
    # bf16 matmul operands with f32 accumulation: loosen tolerance vs f32 reference.
    assert jnp.allclose(out_auto, ref, atol=3e-2, rtol=3e-2), \
        float(jnp.max(jnp.abs(out_auto - ref)))

    # 2) Forced multi-stripe path: exercises the f32 accumulator over the reduction axis.
    out_acc = jax.block_until_ready(feed_forward(x, w1, b1, w2, b2, tile_m=32, tile_h=256))
    assert jnp.allclose(out_acc, ref, atol=3e-2, rtol=3e-2), \
        float(jnp.max(jnp.abs(out_acc - ref)))

    print("KERNEL_OK")
</pallas_src>

<mosaic_0001>
module attributes {stable_mosaic.version = 11 : i64} {
  func.func @ffn_kernel_single(%arg0: i32, %arg1: memref<64x128xbf16, #tpu.memory_space<vmem>>, %arg2: memref<128x512xbf16, #tpu.memory_space<vmem>>, %arg3: memref<1x512xf32, #tpu.memory_space<vmem>>, %arg4: memref<512x128xbf16, #tpu.memory_space<vmem>>, %arg5: memref<1x128xf32, #tpu.memory_space<vmem>>, %arg6: memref<64x128xf32, #tpu.memory_space<vmem>>) attributes {dimension_semantics = [#tpu.dimension_semantics<parallel>], iteration_bounds = array<i64: 1>, scalar_prefetch = 0 : i64, scratch_operands = 0 : i64, tpu.core_type = #tpu.core_type<tc>, window_params = [{transform_indices = @transform_0, window_bounds = array<i64: 64, 128>}, {pipeline_mode = #tpu.pipeline_mode<synchronous>, transform_indices = @transform_1, window_bounds = array<i64: 128, 512>}, {pipeline_mode = #tpu.pipeline_mode<synchronous>, transform_indices = @transform_2, window_bounds = array<i64: 1, 512>}, {pipeline_mode = #tpu.pipeline_mode<synchronous>, transform_indices = @transform_3, window_bounds = array<i64: 512, 128>}, {pipeline_mode = #tpu.pipeline_mode<synchronous>, transform_indices = @transform_4, window_bounds = array<i64: 1, 128>}, {transform_indices = @transform_5, window_bounds = array<i64: 64, 128>}]} {
    %c0 = arith.constant 0 : index
    %c0_0 = arith.constant 0 : index
    %0 = vector.load %arg1[%c0, %c0_0] : memref<64x128xbf16, #tpu.memory_space<vmem>>, vector<64x128xbf16>
    %c0_1 = arith.constant 0 : index
    %c0_2 = arith.constant 0 : index
    %1 = vector.load %arg2[%c0_1, %c0_2] : memref<128x512xbf16, #tpu.memory_space<vmem>>, vector<128x512xbf16>
    %cst = arith.constant dense<0.000000e+00> : vector<64x512xf32>
    %2 = tpu.matmul %0, %1, %cst {dimension_numbers = #tpu.dot_dimension_numbers<[1], [0], [0], [1], [0, 0, 1, 1], [], []>} : vector<64x128xbf16>, vector<128x512xbf16>, vector<64x512xf32> -> vector<64x512xf32>
    %c0_3 = arith.constant 0 : index
    %c0_4 = arith.constant 0 : index
    %3 = vector.load %arg3[%c0_3, %c0_4] : memref<1x512xf32, #tpu.memory_space<vmem>>, vector<1x512xf32>
    %4 = vector.broadcast %3 : vector<1x512xf32> to vector<64x512xf32>
    %5 = arith.addf %2, %4 : vector<64x512xf32>
    %6 = arith.negf %5 : vector<64x512xf32>
    %7 = math.exp %6 : vector<64x512xf32>
    %cst_5 = arith.constant 1.000000e+00 : f32
    %8 = vector.broadcast %cst_5 : f32 to vector<64x512xf32>
    %9 = arith.addf %8, %7 : vector<64x512xf32>
    %10 = arith.divf %8, %9 : vector<64x512xf32>
    %11 = arith.mulf %5, %10 : vector<64x512xf32>
    %12 = arith.truncf %11 : vector<64x512xf32> to vector<64x512xbf16>
    %c0_6 = arith.constant 0 : index
    %c0_7 = arith.constant 0 : index
    %13 = vector.load %arg4[%c0_6, %c0_7] : memref<512x128xbf16, #tpu.memory_space<vmem>>, vector<512x128xbf16>
    %cst_8 = arith.constant dense<0.000000e+00> : vector<64x128xf32>
    %14 = tpu.matmul %12, %13, %cst_8 {dimension_numbers = #tpu.dot_dimension_numbers<[1], [0], [0], [1], [0, 0, 1, 1], [], []>} : vector<64x512xbf16>, vector<512x128xbf16>, vector<64x128xf32> -> vector<64x128xf32>
    %c0_9 = arith.constant 0 : index
    %c0_10 = arith.constant 0 : index
    %15 = vector.load %arg5[%c0_9, %c0_10] : memref<1x128xf32, #tpu.memory_space<vmem>>, vector<1x128xf32>
    %16 = vector.broadcast %15 : vector<1x128xf32> to vector<64x128xf32>
    %17 = arith.addf %14, %16 : vector<64x128xf32>
    %c0_11 = arith.constant 0 : index
    %c0_12 = arith.constant 0 : index
    %18 = vector.load %arg6[%c0_11, %c0_12] : memref<64x128xf32, #tpu.memory_space<vmem>>, vector<64x128xf32>
    tpu.vector_store %arg6[%c0_11, %c0_12], %17 {strides = array<i32>} : memref<64x128xf32, #tpu.memory_space<vmem>>, vector<64x128xf32>,
    return
  }
  func.func @transform_0(%arg0: i32) -> (i32, i32) {
    %c0_i32 = arith.constant 0 : i32
    %c0_i32_0 = arith.constant 0 : i32
    return %arg0, %c0_i32 : i32, i32
  }
  func.func @transform_1(%arg0: i32) -> (i32, i32) {
    %c0_i32 = arith.constant 0 : i32
    %c0_i32_0 = arith.constant 0 : i32
    %c0_i32_1 = arith.constant 0 : i32
    return %c0_i32, %c0_i32_0 : i32, i32
  }
  func.func @transform_2(%arg0: i32) -> (i32, i32) {
    %c0_i32 = arith.constant 0 : i32
    %c0_i32_0 = arith.constant 0 : i32
    %c0_i32_1 = arith.constant 0 : i32
    return %c0_i32, %c0_i32_0 : i32, i32
  }
  func.func @transform_3(%arg0: i32) -> (i32, i32) {
    %c0_i32 = arith.constant 0 : i32
    %c0_i32_0 = arith.constant 0 : i32
    %c0_i32_1 = arith.constant 0 : i32
    return %c0_i32, %c0_i32_0 : i32, i32
  }
  func.func @transform_4(%arg0: i32) -> (i32, i32) {
    %c0_i32 = arith.constant 0 : i32
    %c0_i32_0 = arith.constant 0 : i32
    %c0_i32_1 = arith.constant 0 : i32
    return %c0_i32, %c0_i32_0 : i32, i32
  }
  func.func @transform_5(%arg0: i32) -> (i32, i32) {
    %c0_i32 = arith.constant 0 : i32
    %c0_i32_0 = arith.constant 0 : i32
    return %arg0, %c0_i32 : i32, i32
  }
}

</mosaic_0001>

<llo_original>
// kernel: tpu_custom_call.1
$region0: #{tpu_custom_call.1}
  #allocation0 [shape = 'u32[]', space=smem, size = 0x4, offset = 0x4, fixed_abs, tag = 'smem constant byte address 0x4 - core index']
  #allocation1 [shape = 'u32[144,128]{1,0:T(1,128)}', space=vmem, size = 0x12000, scoped, tag = 'internal scratch']
  %s0 = inlined_call_operand.hbm [shape: bf16[64,128], index: 0, kind: input, shape index: {}]
  %s1 = inlined_call_operand.hbm [shape: bf16[128,512], index: 1, kind: input, shape index: {}]
  %s2 = inlined_call_operand.hbm [shape: f32[1,512], index: 2, kind: input, shape index: {}]
  %s3 = inlined_call_operand.hbm [shape: bf16[512,128], index: 3, kind: input, shape index: {}]
  %s4 = inlined_call_operand.hbm [shape: f32[1,128], index: 4, kind: input, shape index: {}]
  %s5 = inlined_call_operand.hbm [shape: f32[64,128], index: 5, kind: output, shape index: {}]
  %s6 = sld [smem:[#allocation0]]
  $region50: #{tpu_custom_call.1} parent=0
    _
  %s8 = ssub.s32 1, %s6
  %s9 = scalar_select 0, %s8, %s6
  $region1: #{tpu_custom_call.1} parent=0
    #allocation2 [shape = 'u8[16384]{0}', space=vmem, size = 0x4000, scoped, tag = 'input window, operand 0, single buffered']
    #allocation3 [shape = 's32[1]{0}', space=sflag, size = 0x4, scoped, tag = 'scoped memory for tpu_custom_call.1']
    #allocation4 [shape = 's32[1]{0}', space=sflag, size = 0x4, scoped, tag = 'scoped memory for tpu_custom_call.1']
    #allocation5 [shape = 'u8[131072]{0}', space=vmem, size = 0x20000, scoped, tag = 'input window, operand 1, single buffered']
    #allocation6 [shape = 's32[1]{0}', space=sflag, size = 0x4, scoped, tag = 'scoped memory for tpu_custom_call.1']
    #allocation7 [shape = 'u8[2048]{0}', space=vmem, size = 0x800, scoped, tag = 'input window, operand 2, single buffered']
    #allocation8 [shape = 'u8[131072]{0}', space=vmem, size = 0x20000, scoped, tag = 'input window, operand 3, single buffered']
    #allocation9 [shape = 's32[1]{0}', space=sflag, size = 0x4, scoped, tag = 'scoped memory for tpu_custom_call.1']
    #allocation10 [shape = 'u8[512]{0}', space=vmem, size = 0x400, scoped, tag = 'input window, operand 4, single buffered']
    #allocation11 [shape = 'u8[32768]{0}', space=vmem, size = 0x8000, scoped, tag = 'output window, operand 0, single buffered']
    %10 = vsyncpa [#allocation3], 0
    %11 = vsyncpa [#allocation6], 0
    %12 = vsyncpa [#allocation9], 0
    %13 = vsyncpa [#allocation4], 0
    // Predicated region
    $region2: #{tpu_custom_call.1} parent=1 // pred_check
      _
    $region3: #{tpu_custom_call.1} parent=1 // pred_check_branch
      %15 = sbr.rel (0) target = $region5
    $region4: #{tpu_custom_call.1} parent=1 // pred_region
      %s17 = ssub.s32 512, 512
      %18 = vsyncadd [#allocation3], %s17
      %s19 = sshll.u32 [#allocation2], 4
      %s20 = int_to_ptr.vmem [resolvable:$true] %s19
      %25 = dma.hbm_to_vmem [thread:$0]  %s0, 512, %s20, [#allocation3], 64, 64, 4
    $region5: #{tpu_custom_call.1} parent=1 // pred_fallthru
      _
    // Predicated region
    $region6: #{tpu_custom_call.1} parent=1 // pred_check
      _
    $region7: #{tpu_custom_call.1} parent=1 // pred_check_branch
      %27 = sbr.rel (0) target = $region9
    $region8: #{tpu_custom_call.1} parent=1 // pred_region
      %s29 = ssub.s32 4096, 4096
      %30 = vsyncadd [#allocation6], %s29
      %s31 = sshll.u32 [#allocation5], 4
      %s32 = int_to_ptr.vmem [resolvable:$true] %s31
      %37 = dma.hbm_to_vmem [thread:$0]  %s1, 4096, %s32, [#allocation6], 256, 256, 16
    $region9: #{tpu_custom_call.1} parent=1 // pred_fallthru
      _
    // Predicated region
    $region10: #{tpu_custom_call.1} parent=1 // pred_check
      _
    $region11: #{tpu_custom_call.1} parent=1 // pred_check_branch
      %39 = sbr.rel (0) target = $region13
    $region12: #{tpu_custom_call.1} parent=1 // pred_region
      %s41 = ssub.s32 64, 64
      %42 = vsyncadd [#allocation6], %s41
      %s44 = sshll.u32 [#allocation7], 4
      %s45 = int_to_ptr.vmem [resolvable:$true] %s44
      %47 = dma.hbm_to_vmem [thread:$0]  %s2, 64, %s45, [#allocation6]
    $region13: #{tpu_custom_call.1} parent=1 // pred_fallthru
      _
    // Predicated region
    $region14: #{tpu_custom_call.1} parent=1 // pred_check
      _
    $region15: #{tpu_custom_call.1} parent=1 // pred_check_branch
      %49 = sbr.rel (0) target = $region17
    $region16: #{tpu_custom_call.1} parent=1 // pred_region
      %s51 = ssub.s32 4096, 4096
      %52 = vsyncadd [#allocation9], %s51
      %s53 = sshll.u32 [#allocation8], 4
      %s54 = int_to_ptr.vmem [resolvable:$true] %s53
      %59 = dma.hbm_to_vmem [thread:$0]  %s3, 4096, %s54, [#allocation9], 64, 64, 4
    $region17: #{tpu_custom_call.1} parent=1 // pred_fallthru
      _
    // Predicated region
    $region18: #{tpu_custom_call.1} parent=1 // pred_check
      _
    $region19: #{tpu_custom_call.1} parent=1 // pred_check_branch
      %61 = sbr.rel (0) target = $region21
    $region20: #{tpu_custom_call.1} parent=1 // pred_region
      %s63 = ssub.s32 16, 16
      %64 = vsyncadd [#allocation9], %s63
      %s66 = sshll.u32 [#allocation10], 4
      %s67 = int_to_ptr.vmem [resolvable:$true] %s66
      %69 = dma.hbm_to_vmem [thread:$0]  %s4, 16, %s67, [#allocation9]
    $region21: #{tpu_custom_call.1} parent=1 // pred_fallthru
      _
    // Predicated region
    $region22: #{tpu_custom_call.1} parent=1 // pred_check
      _
    $region23: #{tpu_custom_call.1} parent=1 // pred_check_branch
      %71 = sbr.rel (0) target = $region25
    $region24: #{tpu_custom_call.1} parent=1 // pred_region
      %72 = dma.done [#allocation3], 512
    $region25: #{tpu_custom_call.1} parent=1 // pred_fallthru
      _
    // Predicated region
    $region26: #{tpu_custom_call.1} parent=1 // pred_check
      _
    $region27: #{tpu_custom_call.1} parent=1 // pred_check_branch
      %74 = sbr.rel (0) target = $region29
    $region28: #{tpu_custom_call.1} parent=1 // pred_region
      %75 = dma.done [#allocation6], 4096
    $region29: #{tpu_custom_call.1} parent=1 // pred_fallthru
      _
    // Predicated region
    $region30: #{tpu_custom_call.1} parent=1 // pred_check
      _
    $region31: #{tpu_custom_call.1} parent=1 // pred_check_branch
      %77 = sbr.rel (0) target = $region33
    $region32: #{tpu_custom_call.1} parent=1 // pred_region
      %78 = dma.done [#allocation6], 64
    $region33: #{tpu_custom_call.1} parent=1 // pred_fallthru
      _
    // Predicated region
    $region34: #{tpu_custom_call.1} parent=1 // pred_check
      _
    $region35: #{tpu_custom_call.1} parent=1 // pred_check_branch
      %80 = sbr.rel (0) target = $region37
    $region36: #{tpu_custom_call.1} parent=1 // pred_region
      %81 = dma.done [#allocation9], 4096
    $region37: #{tpu_custom_call.1} parent=1 // pred_fallthru
      _
    // Predicated region
    $region38: #{tpu_custom_call.1} parent=1 // pred_check
      _
    $region39: #{tpu_custom_call.1} parent=1 // pred_check_branch
      %83 = sbr.rel (0) target = $region41
    $region40: #{tpu_custom_call.1} parent=1 // pred_region
      %84 = dma.done [#allocation9], 16
    $region41: #{tpu_custom_call.1} parent=1 // pred_fallthru
      _
    %v86 = vld [vmem:[#allocation2] sm:$0xf]
    %v87 = vld [vmem:[#allocation2 + $0x4] sm:$0xf]
    %v88 = vld [vmem:[#allocation2 + $0x8] sm:$0xf]
    %v89 = vld [vmem:[#allocation2 + $0xc] sm:$0xf]
    %v90 = vld [vmem:[#allocation2 + $0x10] sm:$0xf]
    %v91 = vld [vmem:[#allocation2 + $0x14] sm:$0xf]
    %v92 = vld [vmem:[#allocation2 + $0x18] sm:$0xf]
    %v93 = vld [vmem:[#allocation2 + $0x1c] sm:$0xf]
    %v94 = vld [vmem:[#allocation5] sm:$0xff]
    %v95 = vld [vmem:[#allocation5 + $0x8] sm:$0xff]
    %v96 = vld [vmem:[#allocation5 + $0x10] sm:$0xff]
    %v97 = vld [vmem:[#allocation5 + $0x18] sm:$0xff]
    %v98 = vld [vmem:[#allocation5 + $0x20] sm:$0xff]
    %v99 = vld [vmem:[#allocation5 + $0x28] sm:$0xff]
    %v100 = vld [vmem:[#allocation5 + $0x30] sm:$0xff]
    %v101 = vld [vmem:[#allocation5 + $0x38] sm:$0xff]
    %v102 = vld [vmem:[#allocation5 + $0x40] sm:$0xff]
    %v103 = vld [vmem:[#allocation5 + $0x48] sm:$0xff]
    %v104 = vld [vmem:[#allocation5 + $0x50] sm:$0xff]
    %v105 = vld [vmem:[#allocation5 + $0x58] sm:$0xff]
    %v106 = vld [vmem:[#allocation5 + $0x60] sm:$0xff]
    %v107 = vld [vmem:[#allocation5 + $0x68] sm:$0xff]
    %v108 = vld [vmem:[#allocation5 + $0x70] sm:$0xff]
    %v109 = vld [vmem:[#allocation5 + $0x78] sm:$0xff]
    %v110 = vld [vmem:[#allocation5 + $0x80] sm:$0xff]
    %v111 = vld [vmem:[#allocation5 + $0x88] sm:$0xff]
    %v112 = vld [vmem:[#allocation5 + $0x90] sm:$0xff]
    %v113 = vld [vmem:[#allocation5 + $0x98] sm:$0xff]
    %v114 = vld [vmem:[#allocation5 + $0xa0] sm:$0xff]
    %v115 = vld [vmem:[#allocation5 + $0xa8] sm:$0xff]
    %v116 = vld [vmem:[#allocation5 + $0xb0] sm:$0xff]
    %v117 = vld [vmem:[#allocation5 + $0xb8] sm:$0xff]
    %v118 = vld [vmem:[#allocation5 + $0xc0] sm:$0xff]
    %v119 = vld [vmem:[#allocation5 + $0xc8] sm:$0xff]
    %v120 = vld [vmem:[#allocation5 + $0xd0] sm:$0xff]
    %v121 = vld [vmem:[#allocation5 + $0xd8] sm:$0xff]
    %v122 = vld [vmem:[#allocation5 + $0xe0] sm:$0xff]
    %v123 = vld [vmem:[#allocation5 + $0xe8] sm:$0xff]
    %v124 = vld [vmem:[#allocation5 + $0xf0] sm:$0xff]
    %v125 = vld [vmem:[#allocation5 + $0xf8] sm:$0xff]
    %v126 = vld [vmem:[#allocation7] sm:$0xf]
    %v128 = vlaneseq
    %v129 = vshrl.u32 %v128, 7
    %v130 = vsub.s32 0, %v129
    %v131 = vrot.slane %v126, %v130
    %v132 = vlaneseq
    %v133 = vshrl.u32 %v132, 7
    %v134 = vsub.s32 1, %v133
    %v135 = vrot.slane %v126, %v134
    %v136 = vlaneseq
    %v137 = vshrl.u32 %v136, 7
    %v138 = vsub.s32 2, %v137
    %v139 = vrot.slane %v126, %v138
    %v140 = vlaneseq
    %v141 = vshrl.u32 %v140, 7
    %v142 = vsub.s32 3, %v141
    %v143 = vrot.slane %v126, %v142
    %v156 = vunpack.c.l.b16 %v86
    %v157 = vunpack.c.l.b16 %v87
    %v158 = vunpack.c.l.b16 %v88
    %v159 = vunpack.c.l.b16 %v89
    %v160 = vunpack.c.l.b16 %v90
    %v161 = vunpack.c.l.b16 %v91
    %v162 = vunpack.c.l.b16 %v92
    %v163 = vunpack.c.l.b16 %v93
    %v164 = vpack.c.b16 %v157, %v156
    %v165 = vpack.c.b16 %v159, %v158
    %v166 = vpack.c.b16 %v161, %v160
    %v167 = vpack.c.b16 %v163, %v162
    %v204 = vunpack.c.l.b16 %v94
    %v205 = vunpack.c.h.b16 %v94
    %v206 = vunpack.c.l.b16 %v95
    %v207 = vunpack.c.h.b16 %v95
    %v208 = vunpack.c.l.b16 %v96
    %v209 = vunpack.c.h.b16 %v96
    %v210 = vunpack.c.l.b16 %v97
    %v211 = vunpack.c.h.b16 %v97
    %v212 = vunpack.c.l.b16 %v98
    %v213 = vunpack.c.h.b16 %v98
    %v214 = vunpack.c.l.b16 %v99
    %v215 = vunpack.c.h.b16 %v99
    %v216 = vunpack.c.l.b16 %v100
    %v217 = vunpack.c.h.b16 %v100
    %v218 = vunpack.c.l.b16 %v101
    %v219 = vunpack.c.h.b16 %v101
    %v220 = vunpack.c.l.b16 %v102
    %v221 = vunpack.c.h.b16 %v102
    %v222 = vunpack.c.l.b16 %v103
    %v223 = vunpack.c.h.b16 %v103
    %v224 = vunpack.c.l.b16 %v104
    %v225 = vunpack.c.h.b16 %v104
    %v226 = vunpack.c.l.b16 %v105
    %v227 = vunpack.c.h.b16 %v105
    %v228 = vunpack.c.l.b16 %v106
    %v229 = vunpack.c.h.b16 %v106
    %v230 = vunpack.c.l.b16 %v107
    %v231 = vunpack.c.h.b16 %v107
    %v232 = vunpack.c.l.b16 %v108
    %v233 = vunpack.c.h.b16 %v108
    %v234 = vunpack.c.l.b16 %v109
    %v235 = vunpack.c.h.b16 %v109
    %v236 = vunpack.c.l.b16 %v110
    %v237 = vunpack.c.h.b16 %v110
    %v238 = vunpack.c.l.b16 %v111
    %v239 = vunpack.c.h.b16 %v111
    %v240 = vunpack.c.l.b16 %v112
    %v241 = vunpack.c.h.b16 %v112
    %v242 = vunpack.c.l.b16 %v113
    %v243 = vunpack.c.h.b16 %v113
    %v244 = vunpack.c.l.b16 %v114
    %v245 = vunpack.c.h.b16 %v114
    %v246 = vunpack.c.l.b16 %v115
    %v247 = vunpack.c.h.b16 %v115
    %v248 = vunpack.c.l.b16 %v116
    %v249 = vunpack.c.h.b16 %v116
    %v250 = vunpack.c.l.b16 %v117
    %v251 = vunpack.c.h.b16 %v117
    %v252 = vunpack.c.l.b16 %v118
    %v253 = vunpack.c.h.b16 %v118
    %v254 = vunpack.c.l.b16 %v119
    %v255 = vunpack.c.h.b16 %v119
    %v256 = vunpack.c.l.b16 %v120
    %v257 = vunpack.c.h.b16 %v120
    %v258 = vunpack.c.l.b16 %v121
    %v259 = vunpack.c.h.b16 %v121
    %v260 = vunpack.c.l.b16 %v122
    %v261 = vunpack.c.h.b16 %v122
    %v262 = vunpack.c.l.b16 %v123
    %v263 = vunpack.c.h.b16 %v123
    %v264 = vunpack.c.l.b16 %v124
    %v265 = vunpack.c.h.b16 %v124
    %v266 = vunpack.c.l.b16 %v125
    %v267 = vunpack.c.h.b16 %v125
    %v268 = vpack.c.b16 %v208, %v204
    %v269 = vpack.c.b16 %v209, %v205
    %v270 = vpack.c.b16 %v210, %v206
    %v271 = vpack.c.b16 %v211, %v207
    %v272 = vpack.c.b16 %v216, %v212
    %v273 = vpack.c.b16 %v217, %v213
    %v274 = vpack.c.b16 %v218, %v214
    %v275 = vpack.c.b16 %v219, %v215
    %v276 = vpack.c.b16 %v224, %v220
    %v277 = vpack.c.b16 %v225, %v221
    %v278 = vpack.c.b16 %v226, %v222
    %v279 = vpack.c.b16 %v227, %v223
    %v280 = vpack.c.b16 %v232, %v228
    %v281 = vpack.c.b16 %v233, %v229
    %v282 = vpack.c.b16 %v234, %v230
    %v283 = vpack.c.b16 %v235, %v231
    %v284 = vpack.c.b16 %v240, %v236
    %v285 = vpack.c.b16 %v241, %v237
    %v286 = vpack.c.b16 %v242, %v238
    %v287 = vpack.c.b16 %v243, %v239
    %v288 = vpack.c.b16 %v248, %v244
    %v289 = vpack.c.b16 %v249, %v245
    %v290 = vpack.c.b16 %v250, %v246
    %v291 = vpack.c.b16 %v251, %v247
    %v292 = vpack.c.b16 %v256, %v252
    %v293 = vpack.c.b16 %v257, %v253
    %v294 = vpack.c.b16 %v258, %v254
    %v295 = vpack.c.b16 %v259, %v255
    %v296 = vpack.c.b16 %v264, %v260
    %v297 = vpack.c.b16 %v265, %v261
    %v298 = vpack.c.b16 %v266, %v262
    %v299 = vpack.c.b16 %v267, %v263
    %332 = vmatprep.subr.bf16.mxu0 %v269
    %333 = vmatpush1.bf16.msra.mxu0 %v268
    %334 = vmatprep.subr.bf16.mxu0 %v273
    %335 = vmatpush1.bf16.msra.mxu0 %v272
    %336 = vmatprep.subr.bf16.mxu0 %v277
    %337 = vmatpush1.bf16.msra.mxu0 %v276
    %338 = vmatprep.subr.bf16.mxu0 %v281
    %339 = vmatpush1.bf16.msra.mxu0 %v280
    %340 = vmatprep.subr.bf16.mxu0 %v285
    %341 = vmatpush1.bf16.msra.mxu0 %v284
    %342 = vmatprep.subr.bf16.mxu0 %v289
    %343 = vmatpush1.bf16.msra.mxu0 %v288
    %344 = vmatprep.subr.bf16.mxu0 %v293
    %345 = vmatpush1.bf16.msra.mxu0 %v292
    %346 = vmatprep.subr.bf16.mxu0 %v297
    %347 = vmatpush1.bf16.msra.mxu0 %v296
    %348 = vmatprep.subr.bf16.mxu0 0
    %349 = vmatpush1.bf16.msra.mxu0 0
    %350 = vmatprep.subr.bf16.mxu0 0
    %351 = vmatpush1.bf16.msra.mxu0 0
    %352 = vmatprep.subr.bf16.mxu0 0
    %353 = vmatpush1.bf16.msra.mxu0 0
    %354 = vmatprep.subr.bf16.mxu0 0
    %355 = vmatpush1.bf16.msra.mxu0 0
    %356 = vmatprep.subr.bf16.mxu0 0
    %357 = vmatpush1.bf16.msra.mxu0 0
    %358 = vmatprep.subr.bf16.mxu0 0
    %359 = vmatpush1.bf16.msra.mxu0 0
    %360 = vmatprep.subr.bf16.mxu0 0
    %361 = vmatpush1.bf16.msra.mxu0 0
    %362 = vmatprep.subr.bf16.mxu0 0
    %363 = vmatpush1.bf16.msra.mxu0 0
    %364 = vmatprep.mubr.bf16.mxu0 0
    %365 = vmatmul.mubr.bf16.gmra.mrb[0].mxu0 %v164
    %v366 = vpop.f32.mrb[0].mxu0
    %v367 = vadd.f32 %v131, %v366
    %v368 = vpop.f32.mrb[0].mxu0
    %v369 = vadd.f32 %v135, %v368
    %v370 = vpop.f32.mrb[0].mxu0
    %v371 = vadd.f32 %v131, %v370
    %v372 = vpop.f32.mrb[0].mxu0
    %v373 = vadd.f32 %v135, %v372
    %374 = vmatprep.mubr.bf16.mxu0 0
    %375 = vmatmul.mubr.bf16.gmra.mrb[0].mxu0 %v165
    %v376 = vpop.f32.mrb[0].mxu0
    %v377 = vadd.f32 %v131, %v376
    %v378 = vpop.f32.mrb[0].mxu0
    %v379 = vadd.f32 %v135, %v378
    %v380 = vpop.f32.mrb[0].mxu0
    %v381 = vadd.f32 %v131, %v380
    %v382 = vpop.f32.mrb[0].mxu0
    %v383 = vadd.f32 %v135, %v382
    %384 = vmatprep.mubr.bf16.mxu0 0
    %385 = vmatmul.mubr.bf16.gmra.mrb[0].mxu0 %v166
    %v386 = vpop.f32.mrb[0].mxu0
    %v387 = vadd.f32 %v131, %v386
    %v388 = vpop.f32.mrb[0].mxu0
    %v389 = vadd.f32 %v135, %v388
    %v390 = vpop.f32.mrb[0].mxu0
    %v391 = vadd.f32 %v131, %v390
    %v392 = vpop.f32.mrb[0].mxu0
    %v393 = vadd.f32 %v135, %v392
    %394 = vmatprep.mubr.bf16.mxu0 0
    %395 = vmatmul.mubr.bf16.gmra.mrb[0].mxu0 %v167
    %v396 = vpop.f32.mrb[0].mxu0
    %v397 = vadd.f32 %v131, %v396
    %v398 = vpop.f32.mrb[0].mxu0
    %v399 = vadd.f32 %v135, %v398
    %v400 = vpop.f32.mrb[0].mxu0
    %v401 = vadd.f32 %v131, %v400
    %v402 = vpop.f32.mrb[0].mxu0
    %v403 = vadd.f32 %v135, %v402
    %404 = vdwg.mxu0
    %405 = vmatprep.subr.bf16.mxu0 %v271
    %406 = vmatpush1.bf16.msra.mxu0 %v270
    %407 = vmatprep.subr.bf16.mxu0 %v275
    %408 = vmatpush1.bf16.msra.mxu0 %v274
    %409 = vmatprep.subr.bf16.mxu0 %v279
    %410 = vmatpush1.bf16.msra.mxu0 %v278
    %411 = vmatprep.subr.bf16.mxu0 %v283
    %412 = vmatpush1.bf16.msra.mxu0 %v282
    %413 = vmatprep.subr.bf16.mxu0 %v287
    %414 = vmatpush1.bf16.msra.mxu0 %v286
    %415 = vmatprep.subr.bf16.mxu0 %v291
    %416 = vmatpush1.bf16.msra.mxu0 %v290
    %417 = vmatprep.subr.bf16.mxu0 %v295
    %418 = vmatpush1.bf16.msra.mxu0 %v294
    %419 = vmatprep.subr.bf16.mxu0 %v299
    %420 = vmatpush1.bf16.msra.mxu0 %v298
    %421 = vmatprep.subr.bf16.mxu0 0
    %422 = vmatpush1.bf16.msra.mxu0 0
    %423 = vmatprep.subr.bf16.mxu0 0
    %424 = vmatpush1.bf16.msra.mxu0 0
    %425 = vmatprep.subr.bf16.mxu0 0
    %426 = vmatpush1.bf16.msra.mxu0 0
    %427 = vmatprep.subr.bf16.mxu0 0
    %428 = vmatpush1.bf16.msra.mxu0 0
    %429 = vmatprep.subr.bf16.mxu0 0
    %430 = vmatpush1.bf16.msra.mxu0 0
    %431 = vmatprep.subr.bf16.mxu0 0
    %432 = vmatpush1.bf16.msra.mxu0 0
    %433 = vmatprep.subr.bf16.mxu0 0
    %434 = vmatpush1.bf16.msra.mxu0 0
    %435 = vmatprep.subr.bf16.mxu0 0
    %436 = vmatpush1.bf16.msra.mxu0 0
    %437 = vmatprep.mubr.bf16.mxu0 0
    %438 = vmatmul.mubr.bf16.gmra.mrb[0].mxu0 %v164
    %v439 = vpop.f32.mrb[0].mxu0
    %v440 = vadd.f32 %v139, %v439
    %v441 = vpop.f32.mrb[0].mxu0
    %v442 = vadd.f32 %v143, %v441
    %v443 = vpop.f32.mrb[0].mxu0
    %v444 = vadd.f32 %v139, %v443
    %v445 = vpop.f32.mrb[0].mxu0
    %v446 = vadd.f32 %v143, %v445
    %447 = vmatprep.mubr.bf16.mxu0 0
    %448 = vmatmul.mubr.bf16.gmra.mrb[0].mxu0 %v165
    %v449 = vpop.f32.mrb[0].mxu0
    %v450 = vadd.f32 %v139, %v449
    %v451 = vpop.f32.mrb[0].mxu0
    %v452 = vadd.f32 %v143, %v451
    %v453 = vpop.f32.mrb[0].mxu0
    %v454 = vadd.f32 %v139, %v453
    %v455 = vpop.f32.mrb[0].mxu0
    %v456 = vadd.f32 %v143, %v455
    %457 = vmatprep.mubr.bf16.mxu0 0
    %458 = vmatmul.mubr.bf16.gmra.mrb[0].mxu0 %v166
    %v459 = vpop.f32.mrb[0].mxu0
    %v460 = vadd.f32 %v139, %v459
    %v461 = vpop.f32.mrb[0].mxu0
    %v462 = vadd.f32 %v143, %v461
    %v463 = vpop.f32.mrb[0].mxu0
    %v464 = vadd.f32 %v139, %v463
    %v465 = vpop.f32.mrb[0].mxu0
    %v466 = vadd.f32 %v143, %v465
    %467 = vmatprep.mubr.bf16.mxu0 0
    %468 = vmatmul.mubr.bf16.gmra.mrb[0].mxu0 %v167
    %v469 = vpop.f32.mrb[0].mxu0
    %v470 = vadd.f32 %v139, %v469
    %v471 = vpop.f32.mrb[0].mxu0
    %v472 = vadd.f32 %v143, %v471
    %v473 = vpop.f32.mrb[0].mxu0
    %v474 = vadd.f32 %v139, %v473
    %v475 = vpop.f32.mrb[0].mxu0
    %v476 = vadd.f32 %v143, %v475
    %477 = vdwg.mxu0
    %v478 = vxor.u32 %v367, 2147483648
    %v479 = vxor.u32 %v369, 2147483648
    %v480 = vxor.u32 %v440, 2147483648
    %v481 = vxor.u32 %v442, 2147483648
    %v482 = vxor.u32 %v371, 2147483648
    %v483 = vxor.u32 %v373, 2147483648
    %v484 = vxor.u32 %v444, 2147483648
    %v485 = vxor.u32 %v446, 2147483648
    %v486 = vxor.u32 %v377, 2147483648
    %v487 = vxor.u32 %v379, 2147483648
    %v488 = vxor.u32 %v450, 2147483648
    %v489 = vxor.u32 %v452, 2147483648
    %v490 = vxor.u32 %v381, 2147483648
    %v491 = vxor.u32 %v383, 2147483648
    %v492 = vxor.u32 %v454, 2147483648
    %v493 = vxor.u32 %v456, 2147483648
    %v494 = vxor.u32 %v387, 2147483648
    %v495 = vxor.u32 %v389, 2147483648
    %v496 = vxor.u32 %v460, 2147483648
    %v497 = vxor.u32 %v462, 2147483648
    %v498 = vxor.u32 %v391, 2147483648
    %v499 = vxor.u32 %v393, 2147483648
    %v500 = vxor.u32 %v464, 2147483648
    %v501 = vxor.u32 %v466, 2147483648
    %v502 = vxor.u32 %v397, 2147483648
    %v503 = vxor.u32 %v399, 2147483648
    %v504 = vxor.u32 %v470, 2147483648
    %v505 = vxor.u32 %v472, 2147483648
    %v506 = vxor.u32 %v401, 2147483648
    %v507 = vxor.u32 %v403, 2147483648
    %v508 = vxor.u32 %v474, 2147483648
    %v509 = vxor.u32 %v476, 2147483648
    %v510 = vmul.f32 %v478, 1.442695
    %v511 = vpow.pop %v510
    %v512 = vmul.f32 %v479, 1.442695
    %v513 = vpow.pop %v512
    %v514 = vmul.f32 %v480, 1.442695
    %v515 = vpow.pop %v514
    %v516 = vmul.f32 %v481, 1.442695
    %v517 = vpow.pop %v516
    %v518 = vmul.f32 %v482, 1.442695
    %v519 = vpow.pop %v518
    %v520 = vmul.f32 %v483, 1.442695
    %v521 = vpow.pop %v520
    %v522 = vmul.f32 %v484, 1.442695
    %v523 = vpow.pop %v522
    %v524 = vmul.f32 %v485, 1.442695
    %v525 = vpow.pop %v524
    %v526 = vmul.f32 %v486, 1.442695
    %v527 = vpow.pop %v526
    %v528 = vmul.f32 %v487, 1.442695
    %v529 = vpow.pop %v528
    %v530 = vmul.f32 %v488, 1.442695
    %v531 = vpow.pop %v530
    %v532 = vmul.f32 %v489, 1.442695
    %v533 = vpow.pop %v532
    %v534 = vmul.f32 %v490, 1.442695
    %v535 = vpow.pop %v534
    %v536 = vmul.f32 %v491, 1.442695
    %v537 = vpow.pop %v536
    %v538 = vmul.f32 %v492, 1.442695
    %v539 = vpow.pop %v538
    %v540 = vmul.f32 %v493, 1.442695
    %v541 = vpow.pop %v540
    %v542 = vmul.f32 %v494, 1.442695
    %v543 = vpow.pop %v542
    %v544 = vmul.f32 %v495, 1.442695
    %v545 = vpow.pop %v544
    %v546 = vmul.f32 %v496, 1.442695
    %v547 = vpow.pop %v546
    %v548 = vmul.f32 %v497, 1.442695
    %v549 = vpow.pop %v548
    %v550 = vmul.f32 %v498, 1.442695
    %v551 = vpow.pop %v550
    %v552 = vmul.f32 %v499, 1.442695
    %v553 = vpow.pop %v552
    %v554 = vmul.f32 %v500, 1.442695
    %v555 = vpow.pop %v554
    %v556 = vmul.f32 %v501, 1.442695
    %v557 = vpow.pop %v556
    %v558 = vmul.f32 %v502, 1.442695
    %v559 = vpow.pop %v558
    %v560 = vmul.f32 %v503, 1.442695
    %v561 = vpow.pop %v560
    %v562 = vmul.f32 %v504, 1.442695
    %v563 = vpow.pop %v562
    %v564 = vmul.f32 %v505, 1.442695
    %v565 = vpow.pop %v564
    %v566 = vmul.f32 %v506, 1.442695
    %v567 = vpow.pop %v566
    %v568 = vmul.f32 %v507, 1.442695
    %v569 = vpow.pop %v568
    %v570 = vmul.f32 %v508, 1.442695
    %v571 = vpow.pop %v570
    %v572 = vmul.f32 %v509, 1.442695
    %v573 = vpow.pop %v572
    %v574 = vadd.f32 %v511, 1.0
    %v575 = vadd.f32 %v513, 1.0
    %v576 = vadd.f32 %v515, 1.0
    %v577 = vadd.f32 %v517, 1.0
    %v578 = vadd.f32 %v519, 1.0
    %v579 = vadd.f32 %v521, 1.0
    %v580 = vadd.f32 %v523, 1.0
    %v581 = vadd.f32 %v525, 1.0
    %v582 = vadd.f32 %v527, 1.0
    %v583 = vadd.f32 %v529, 1.0
    %v584 = vadd.f32 %v531, 1.0
    %v585 = vadd.f32 %v533, 1.0
    %v586 = vadd.f32 %v535, 1.0
    %v587 = vadd.f32 %v537, 1.0
    %v588 = vadd.f32 %v539, 1.0
    %v589 = vadd.f32 %v541, 1.0
    %v590 = vadd.f32 %v543, 1.0
    %v591 = vadd.f32 %v545, 1.0
    %v592 = vadd.f32 %v547, 1.0
    %v593 = vadd.f32 %v549, 1.0
    %v594 = vadd.f32 %v551, 1.0
    %v595 = vadd.f32 %v553, 1.0
    %v596 = vadd.f32 %v555, 1.0
    %v597 = vadd.f32 %v557, 1.0
    %v598 = vadd.f32 %v559, 1.0
    %v599 = vadd.f32 %v561, 1.0
    %v600 = vadd.f32 %v563, 1.0
    %v601 = vadd.f32 %v565, 1.0
    %v602 = vadd.f32 %v567, 1.0
    %v603 = vadd.f32 %v569, 1.0
    %v604 = vadd.f32 %v571, 1.0
    %v605 = vadd.f32 %v573, 1.0
    %v606 = vrcp.pop %v574
    %v607 = vmul.f32 1.0, %v606
    %v608 = vrcp.pop %v575
    %v609 = vmul.f32 1.0, %v608
    %v610 = vrcp.pop %v576
    %v611 = vmul.f32 1.0, %v610
    %v612 = vrcp.pop %v577
    %v613 = vmul.f32 1.0, %v612
    %v614 = vrcp.pop %v578
    %v615 = vmul.f32 1.0, %v614
    %v616 = vrcp.pop %v579
    %v617 = vmul.f32 1.0, %v616
    %v618 = vrcp.pop %v580
    %v619 = vmul.f32 1.0, %v618
    %v620 = vrcp.pop %v581
    %v621 = vmul.f32 1.0, %v620
    %v622 = vrcp.pop %v582
    %v623 = vmul.f32 1.0, %v622
    %v624 = vrcp.pop %v583
    %v625 = vmul.f32 1.0, %v624
    %v626 = vrcp.pop %v584
    %v627 = vmul.f32 1.0, %v626
    %v628 = vrcp.pop %v585
    %v629 = vmul.f32 1.0, %v628
    %v630 = vrcp.pop %v586
    %v631 = vmul.f32 1.0, %v630
    %v632 = vrcp.pop %v587
    %v633 = vmul.f32 1.0, %v632
    %v634 = vrcp.pop %v588
    %v635 = vmul.f32 1.0, %v634
    %v636 = vrcp.pop %v589
    %v637 = vmul.f32 1.0, %v636
    %v638 = vrcp.pop %v590
    %v639 = vmul.f32 1.0, %v638
    %v640 = vrcp.pop %v591
    %v641 = vmul.f32 1.0, %v640
    %v642 = vrcp.pop %v592
    %v643 = vmul.f32 1.0, %v642
    %v644 = vrcp.pop %v593
    %v645 = vmul.f32 1.0, %v644
    %v646 = vrcp.pop %v594
    %v647 = vmul.f32 1.0, %v646
    %v648 = vrcp.pop %v595
    %v649 = vmul.f32 1.0, %v648
    %v650 = vrcp.pop %v596
    %v651 = vmul.f32 1.0, %v650
    %v652 = vrcp.pop %v597
    %v653 = vmul.f32 1.0, %v652
    %v654 = vrcp.pop %v598
    %v655 = vmul.f32 1.0, %v654
    %v656 = vrcp.pop %v599
    %v657 = vmul.f32 1.0, %v656
    %v658 = vrcp.pop %v600
    %v659 = vmul.f32 1.0, %v658
    %v660 = vrcp.pop %v601
    %v661 = vmul.f32 1.0, %v660
    %v662 = vrcp.pop %v602
    %v663 = vmul.f32 1.0, %v662
    %v664 = vrcp.pop %v603
    %v665 = vmul.f32 1.0, %v664
    %v666 = vrcp.pop %v604
    %v667 = vmul.f32 1.0, %v666
    %v668 = vrcp.pop %v605
    %v669 = vmul.f32 1.0, %v668
    %v670 = vmul.f32 %v367, %v607
    %v671 = vmul.f32 %v369, %v609
    %v672 = vmul.f32 %v440, %v611
    %v673 = vmul.f32 %v442, %v613
    %v674 = vmul.f32 %v371, %v615
    %v675 = vmul.f32 %v373, %v617
    %v676 = vmul.f32 %v444, %v619
    %v677 = vmul.f32 %v446, %v621
    %v678 = vmul.f32 %v377, %v623
    %v679 = vmul.f32 %v379, %v625
    %v680 = vmul.f32 %v450, %v627
    %v681 = vmul.f32 %v452, %v629
    %v682 = vmul.f32 %v381, %v631
    %v683 = vmul.f32 %v383, %v633
    %v684 = vmul.f32 %v454, %v635
    %v685 = vmul.f32 %v456, %v637
    %v686 = vmul.f32 %v387, %v639
    %v687 = vmul.f32 %v389, %v641
    %v688 = vmul.f32 %v460, %v643
    %v689 = vmul.f32 %v462, %v645
    %v690 = vmul.f32 %v391, %v647
    %v691 = vmul.f32 %v393, %v649
    %v692 = vmul.f32 %v464, %v651
    %v693 = vmul.f32 %v466, %v653
    %v694 = vmul.f32 %v397, %v655
    %v695 = vmul.f32 %v399, %v657
    %v696 = vmul.f32 %v470, %v659
    %v697 = vmul.f32 %v472, %v661
    %v698 = vmul.f32 %v401, %v663
    %v699 = vmul.f32 %v403, %v665
    %v700 = vmul.f32 %v474, %v667
    %v701 = vmul.f32 %v476, %v669
    %v702 = vpack.c.bf16 %v674, %v670
    %v703 = vpack.c.bf16 %v675, %v671
    %v704 = vpack.c.bf16 %v676, %v672
    %v705 = vpack.c.bf16 %v677, %v673
    %v706 = vpack.c.bf16 %v682, %v678
    %v707 = vpack.c.bf16 %v683, %v679
    %v708 = vpack.c.bf16 %v684, %v680
    %v709 = vpack.c.bf16 %v685, %v681
    %v710 = vpack.c.bf16 %v690, %v686
    %v711 = vpack.c.bf16 %v691, %v687
    %v712 = vpack.c.bf16 %v692, %v688
    %v713 = vpack.c.bf16 %v693, %v689
    %v714 = vpack.c.bf16 %v698, %v694
    %v715 = vpack.c.bf16 %v699, %v695
    %v716 = vpack.c.bf16 %v700, %v696
    %v717 = vpack.c.bf16 %v701, %v697
    %v718 = vld [vmem:[#allocation8] sm:$0xf]
    %v719 = vld [vmem:[#allocation8 + $0x4] sm:$0xf]
    %v720 = vld [vmem:[#allocation8 + $0x8] sm:$0xf]
    %v721 = vld [vmem:[#allocation8 + $0xc] sm:$0xf]
    %v722 = vld [vmem:[#allocation8 + $0x10] sm:$0xf]
    %v723 = vld [vmem:[#allocation8 + $0x14] sm:$0xf]
    %v724 = vld [vmem:[#allocation8 + $0x18] sm:$0xf]
    %v725 = vld [vmem:[#allocation8 + $0x1c] sm:$0xf]
    %v726 = vld [vmem:[#allocation8 + $0x20] sm:$0xf]
    %v727 = vld [vmem:[#allocation8 + $0x24] sm:$0xf]
    %v728 = vld [vmem:[#allocation8 + $0x28] sm:$0xf]
    %v729 = vld [vmem:[#allocation8 + $0x2c] sm:$0xf]
    %v730 = vld [vmem:[#allocation8 + $0x30] sm:$0xf]
    %v731 = vld [vmem:[#allocation8 + $0x34] sm:$0xf]
    %v732 = vld [vmem:[#allocation8 + $0x38] sm:$0xf]
    %v733 = vld [vmem:[#allocation8 + $0x3c] sm:$0xf]
    %v734 = vld [vmem:[#allocation8 + $0x40] sm:$0xf]
    %v735 = vld [vmem:[#allocation8 + $0x44] sm:$0xf]
    %v736 = vld [vmem:[#allocation8 + $0x48] sm:$0xf]
    %v737 = vld [vmem:[#allocation8 + $0x4c] sm:$0xf]
    %v738 = vld [vmem:[#allocation8 + $0x50] sm:$0xf]
    %v739 = vld [vmem:[#allocation8 + $0x54] sm:$0xf]
    %v740 = vld [vmem:[#allocation8 + $0x58] sm:$0xf]
    %v741 = vld [vmem:[#allocation8 + $0x5c] sm:$0xf]
    %v742 = vld [vmem:[#allocation8 + $0x60] sm:$0xf]
    %v743 = vld [vmem:[#allocation8 + $0x64] sm:$0xf]
    %v744 = vld [vmem:[#allocation8 + $0x68] sm:$0xf]
    %v745 = vld [vmem:[#allocation8 + $0x6c] sm:$0xf]
    %v746 = vld [vmem:[#allocation8 + $0x70] sm:$0xf]
    %v747 = vld [vmem:[#allocation8 + $0x74] sm:$0xf]
    %v748 = vld [vmem:[#allocation8 + $0x78] sm:$0xf]
    %v749 = vld [vmem:[#allocation8 + $0x7c] sm:$0xf]
    %v750 = vld [vmem:[#allocation8 + $0x80] sm:$0xf]
    %v751 = vld [vmem:[#allocation8 + $0x84] sm:$0xf]
    %v752 = vld [vmem:[#allocation8 + $0x88] sm:$0xf]
    %v753 = vld [vmem:[#allocation8 + $0x8c] sm:$0xf]
    %v754 = vld [vmem:[#allocation8 + $0x90] sm:$0xf]
    %v755 = vld [vmem:[#allocation8 + $0x94] sm:$0xf]
    %v756 = vld [vmem:[#allocation8 + $0x98] sm:$0xf]
    %v757 = vld [vmem:[#allocation8 + $0x9c] sm:$0xf]
    %v758 = vld [vmem:[#allocation8 + $0xa0] sm:$0xf]
    %v759 = vld [vmem:[#allocation8 + $0xa4] sm:$0xf]
    %v760 = vld [vmem:[#allocation8 + $0xa8] sm:$0xf]
    %v761 = vld [vmem:[#allocation8 + $0xac] sm:$0xf]
    %v762 = vld [vmem:[#allocation8 + $0xb0] sm:$0xf]
    %v763 = vld [vmem:[#allocation8 + $0xb4] sm:$0xf]
    %v764 = vld [vmem:[#allocation8 + $0xb8] sm:$0xf]
    %v765 = vld [vmem:[#allocation8 + $0xbc] sm:$0xf]
    %v766 = vld [vmem:[#allocation8 + $0xc0] sm:$0xf]
    %v767 = vld [vmem:[#allocation8 + $0xc4] sm:$0xf]
    %v768 = vld [vmem:[#allocation8 + $0xc8] sm:$0xf]
    %v769 = vld [vmem:[#allocation8 + $0xcc] sm:$0xf]
    %v770 = vld [vmem:[#allocation8 + $0xd0] sm:$0xf]
    %v771 = vld [vmem:[#allocation8 + $0xd4] sm:$0xf]
    %v772 = vld [vmem:[#allocation8 + $0xd8] sm:$0xf]
    %v773 = vld [vmem:[#allocation8 + $0xdc] sm:$0xf]
    %v774 = vld [vmem:[#allocation8 + $0xe0] sm:$0xf]
    %v775 = vld [vmem:[#allocation8 + $0xe4] sm:$0xf]
    %v776 = vld [vmem:[#allocation8 + $0xe8] sm:$0xf]
    %v777 = vld [vmem:[#allocation8 + $0xec] sm:$0xf]
    %v778 = vld [vmem:[#allocation8 + $0xf0] sm:$0xf]
    %v779 = vld [vmem:[#allocation8 + $0xf4] sm:$0xf]
    %v780 = vld [vmem:[#allocation8 + $0xf8] sm:$0xf]
    %v781 = vld [vmem:[#allocation8 + $0xfc] sm:$0xf]
    %v782 = vld [vmem:[#allocation10] sm:$0x1]
    %v784 = vlaneseq
    %v785 = vshrl.u32 %v784, 7
    %v786 = vsub.s32 0, %v785
    %v787 = vrot.slane %v782, %v786
    %v853 = vunpack.c.l.b16 %v718
    %v854 = vunpack.c.l.b16 %v719
    %v855 = vunpack.c.l.b16 %v720
    %v856 = vunpack.c.l.b16 %v721
    %v857 = vunpack.c.l.b16 %v722
    %v858 = vunpack.c.l.b16 %v723
    %v859 = vunpack.c.l.b16 %v724
    %v860 = vunpack.c.l.b16 %v725
    %v861 = vunpack.c.l.b16 %v726
    %v862 = vunpack.c.l.b16 %v727
    %v863 = vunpack.c.l.b16 %v728
    %v864 = vunpack.c.l.b16 %v729
    %v865 = vunpack.c.l.b16 %v730
    %v866 = vunpack.c.l.b16 %v731
    %v867 = vunpack.c.l.b16 %v732
    %v868 = vunpack.c.l.b16 %v733
    %v869 = vunpack.c.l.b16 %v734
    %v870 = vunpack.c.l.b16 %v735
    %v871 = vunpack.c.l.b16 %v736
    %v872 = vunpack.c.l.b16 %v737
    %v873 = vunpack.c.l.b16 %v738
    %v874 = vunpack.c.l.b16 %v739
    %v875 = vunpack.c.l.b16 %v740
    %v876 = vunpack.c.l.b16 %v741
    %v877 = vunpack.c.l.b16 %v742
    %v878 = vunpack.c.l.b16 %v743
    %v879 = vunpack.c.l.b16 %v744
    %v880 = vunpack.c.l.b16 %v745
    %v881 = vunpack.c.l.b16 %v746
    %v882 = vunpack.c.l.b16 %v747
    %v883 = vunpack.c.l.b16 %v748
    %v884 = vunpack.c.l.b16 %v749
    %v885 = vunpack.c.l.b16 %v750
    %v886 = vunpack.c.l.b16 %v751
    %v887 = vunpack.c.l.b16 %v752
    %v888 = vunpack.c.l.b16 %v753
    %v889 = vunpack.c.l.b16 %v754
    %v890 = vunpack.c.l.b16 %v755
    %v891 = vunpack.c.l.b16 %v756
    %v892 = vunpack.c.l.b16 %v757
    %v893 = vunpack.c.l.b16 %v758
    %v894 = vunpack.c.l.b16 %v759
    %v895 = vunpack.c.l.b16 %v760
    %v896 = vunpack.c.l.b16 %v761
    %v897 = vunpack.c.l.b16 %v762
    %v898 = vunpack.c.l.b16 %v763
    %v899 = vunpack.c.l.b16 %v764
    %v900 = vunpack.c.l.b16 %v765
    %v901 = vunpack.c.l.b16 %v766
    %v902 = vunpack.c.l.b16 %v767
    %v903 = vunpack.c.l.b16 %v768
    %v904 = vunpack.c.l.b16 %v769
    %v905 = vunpack.c.l.b16 %v770
    %v906 = vunpack.c.l.b16 %v771
    %v907 = vunpack.c.l.b16 %v772
    %v908 = vunpack.c.l.b16 %v773
    %v909 = vunpack.c.l.b16 %v774
    %v910 = vunpack.c.l.b16 %v775
    %v911 = vunpack.c.l.b16 %v776
    %v912 = vunpack.c.l.b16 %v777
    %v913 = vunpack.c.l.b16 %v778
    %v914 = vunpack.c.l.b16 %v779
    %v915 = vunpack.c.l.b16 %v780
    %v916 = vunpack.c.l.b16 %v781
    %v917 = vpack.c.b16 %v854, %v853
    %v918 = vpack.c.b16 %v856, %v855
    %v919 = vpack.c.b16 %v858, %v857
    %v920 = vpack.c.b16 %v860, %v859
    %v921 = vpack.c.b16 %v862, %v861
    %v922 = vpack.c.b16 %v864, %v863
    %v923 = vpack.c.b16 %v866, %v865
    %v924 = vpack.c.b16 %v868, %v867
    %v925 = vpack.c.b16 %v870, %v869
    %v926 = vpack.c.b16 %v872, %v871
    %v927 = vpack.c.b16 %v874, %v873
    %v928 = vpack.c.b16 %v876, %v875
    %v929 = vpack.c.b16 %v878, %v877
    %v930 = vpack.c.b16 %v880, %v879
    %v931 = vpack.c.b16 %v882, %v881
    %v932 = vpack.c.b16 %v884, %v883
    %v933 = vpack.c.b16 %v886, %v885
    %v934 = vpack.c.b16 %v888, %v887
    %v935 = vpack.c.b16 %v890, %v889
    %v936 = vpack.c.b16 %v892, %v891
    %v937 = vpack.c.b16 %v894, %v893
    %v938 = vpack.c.b16 %v896, %v895
    %v939 = vpack.c.b16 %v898, %v897
    %v940 = vpack.c.b16 %v900, %v899
    %v941 = vpack.c.b16 %v902, %v901
    %v942 = vpack.c.b16 %v904, %v903
    %v943 = vpack.c.b16 %v906, %v905
    %v944 = vpack.c.b16 %v908, %v907
    %v945 = vpack.c.b16 %v910, %v909
    %v946 = vpack.c.b16 %v912, %v911
    %v947 = vpack.c.b16 %v914, %v913
    %v948 = vpack.c.b16 %v916, %v915
    %981 = vmatprep.subr.bf16.mxu0 0
    %982 = vmatpush1.bf16.msra.mxu0 %v917
    %983 = vmatprep.subr.bf16.mxu0 0
    %984 = vmatpush1.bf16.msra.mxu0 %v918
    %985 = vmatprep.subr.bf16.mxu0 0
    %986 = vmatpush1.bf16.msra.mxu0 %v919
    %987 = vmatprep.subr.bf16.mxu0 0
    %988 = vmatpush1.bf16.msra.mxu0 %v920
    %989 = vmatprep.subr.bf16.mxu0 0
    %990 = vmatpush1.bf16.msra.mxu0 %v921
    %991 = vmatprep.subr.bf16.mxu0 0
    %992 = vmatpush1.bf16.msra.mxu0 %v922
    %993 = vmatprep.subr.bf16.mxu0 0
    %994 = vmatpush1.bf16.msra.mxu0 %v923
    %995 = vmatprep.subr.bf16.mxu0 0
    %996 = vmatpush1.bf16.msra.mxu0 %v924
    %997 = vmatprep.subr.bf16.mxu0 0
    %998 = vmatpush1.bf16.msra.mxu0 %v925
    %999 = vmatprep.subr.bf16.mxu0 0
    %1000 = vmatpush1.bf16.msra.mxu0 %v926
    %1001 = vmatprep.subr.bf16.mxu0 0
    %1002 = vmatpush1.bf16.msra.mxu0 %v927
    %1003 = vmatprep.subr.bf16.mxu0 0
    %1004 = vmatpush1.bf16.msra.mxu0 %v928
    %1005 = vmatprep.subr.bf16.mxu0 0
    %1006 = vmatpush1.bf16.msra.mxu0 %v929
    %1007 = vmatprep.subr.bf16.mxu0 0
    %1008 = vmatpush1.bf16.msra.mxu0 %v930
    %1009 = vmatprep.subr.bf16.mxu0 0
    %1010 = vmatpush1.bf16.msra.mxu0 %v931
    %1011 = vmatprep.subr.bf16.mxu0 0
    %1012 = vmatpush1.bf16.msra.mxu0 %v932
    %1013 = vmatprep.mubr.bf16.mxu0 %v703
    %1014 = vmatmul.mubr.bf16.gmra.mrb[0].mxu0 %v702
    %v1015 = vpop.f32.mrb[0].mxu0
    %v1016 = vadd.f32 %v787, %v1015
    %v1017 = vpop.f32.mrb[0].mxu0
    %v1018 = vpop.f32.mrb[0].mxu0
    %v1019 = vadd.f32 %v787, %v1018
    %v1020 = vpop.f32.mrb[0].mxu0
    %1021 = vmatprep.mubr.bf16.mxu0 %v707
    %1022 = vmatmul.mubr.bf16.gmra.mrb[0].mxu0 %v706
    %v1023 = vpop.f32.mrb[0].mxu0
    %v1024 = vadd.f32 %v787, %v1023
    %v1025 = vpop.f32.mrb[0].mxu0
    %v1026 = vpop.f32.mrb[0].mxu0
    %v1027 = vadd.f32 %v787, %v1026
    %v1028 = vpop.f32.mrb[0].mxu0
    %1029 = vmatprep.mubr.bf16.mxu0 %v711
    %1030 = vmatmul.mubr.bf16.gmra.mrb[0].mxu0 %v710
    %v1031 = vpop.f32.mrb[0].mxu0
    %v1032 = vadd.f32 %v787, %v1031
    %v1033 = vpop.f32.mrb[0].mxu0
    %v1034 = vpop.f32.mrb[0].mxu0
    %v1035 = vadd.f32 %v787, %v1034
    %v1036 = vpop.f32.mrb[0].mxu0
    %1037 = vmatprep.mubr.bf16.mxu0 %v715
    %1038 = vmatmul.mubr.bf16.gmra.mrb[0].mxu0 %v714
    %v1039 = vpop.f32.mrb[0].mxu0
    %v1040 = vadd.f32 %v787, %v1039
    %v1041 = vpop.f32.mrb[0].mxu0
    %v1042 = vpop.f32.mrb[0].mxu0
    %v1043 = vadd.f32 %v787, %v1042
    %v1044 = vpop.f32.mrb[0].mxu0
    %1045 = vdwg.mxu0
    %1046 = vmatprep.subr.bf16.mxu0 0
    %1047 = vmatpush1.bf16.msra.mxu0 %v933
    %1048 = vmatprep.subr.bf16.mxu0 0
    %1049 = vmatpush1.bf16.msra.mxu0 %v934
    %1050 = vmatprep.subr.bf16.mxu0 0
    %1051 = vmatpush1.bf16.msra.mxu0 %v935
    %1052 = vmatprep.subr.bf16.mxu0 0
    %1053 = vmatpush1.bf16.msra.mxu0 %v936
    %1054 = vmatprep.subr.bf16.mxu0 0
    %1055 = vmatpush1.bf16.msra.mxu0 %v937
    %1056 = vmatprep.subr.bf16.mxu0 0
    %1057 = vmatpush1.bf16.msra.mxu0 %v938
    %1058 = vmatprep.subr.bf16.mxu0 0
    %1059 = vmatpush1.bf16.msra.mxu0 %v939
    %1060 = vmatprep.subr.bf16.mxu0 0
    %1061 = vmatpush1.bf16.msra.mxu0 %v940
    %1062 = vmatprep.subr.bf16.mxu0 0
    %1063 = vmatpush1.bf16.msra.mxu0 %v941
    %1064 = vmatprep.subr.bf16.mxu0 0
    %1065 = vmatpush1.bf16.msra.mxu0 %v942
    %1066 = vmatprep.subr.bf16.mxu0 0
    %1067 = vmatpush1.bf16.msra.mxu0 %v943
    %1068 = vmatprep.subr.bf16.mxu0 0
    %1069 = vmatpush1.bf16.msra.mxu0 %v944
    %1070 = vmatprep.subr.bf16.mxu0 0
    %1071 = vmatpush1.bf16.msra.mxu0 %v945
    %1072 = vmatprep.subr.bf16.mxu0 0
    %1073 = vmatpush1.bf16.msra.mxu0 %v946
    %1074 = vmatprep.subr.bf16.mxu0 0
    %1075 = vmatpush1.bf16.msra.mxu0 %v947
    %1076 = vmatprep.subr.bf16.mxu0 0
    %1077 = vmatpush1.bf16.msra.mxu0 %v948
    %1078 = vmatprep.mubr.bf16.mxu0 %v705
    %1079 = vmatmul.mubr.bf16.gmra.mrb[0].mxu0 %v704
    %v1080 = vpop.f32.mrb[0].mxu0
    %v1081 = vadd.f32 %v1016, %v1080
    %v1082 = vpop.f32.mrb[0].mxu0
    %v1083 = vpop.f32.mrb[0].mxu0
    %v1084 = vadd.f32 %v1019, %v1083
    %v1085 = vpop.f32.mrb[0].mxu0
    %1086 = vmatprep.mubr.bf16.mxu0 %v709
    %1087 = vmatmul.mubr.bf16.gmra.mrb[0].mxu0 %v708
    %v1088 = vpop.f32.mrb[0].mxu0
    %v1089 = vadd.f32 %v1024, %v1088
    %v1090 = vpop.f32.mrb[0].mxu0
    %v1091 = vpop.f32.mrb[0].mxu0
    %v1092 = vadd.f32 %v1027, %v1091
    %v1093 = vpop.f32.mrb[0].mxu0
    %1094 = vmatprep.mubr.bf16.mxu0 %v713
    %1095 = vmatmul.mubr.bf16.gmra.mrb[0].mxu0 %v712
    %v1096 = vpop.f32.mrb[0].mxu0
    %v1097 = vadd.f32 %v1032, %v1096
    %v1098 = vpop.f32.mrb[0].mxu0
    %v1099 = vpop.f32.mrb[0].mxu0
    %v1100 = vadd.f32 %v1035, %v1099
    %v1101 = vpop.f32.mrb[0].mxu0
    %1102 = vmatprep.mubr.bf16.mxu0 %v717
    %1103 = vmatmul.mubr.bf16.gmra.mrb[0].mxu0 %v716
    %v1104 = vpop.f32.mrb[0].mxu0
    %v1105 = vadd.f32 %v1040, %v1104
    %v1106 = vpop.f32.mrb[0].mxu0
    %v1107 = vpop.f32.mrb[0].mxu0
    %v1108 = vadd.f32 %v1043, %v1107
    %v1109 = vpop.f32.mrb[0].mxu0
    %1110 = vdwg.mxu0
    %1111 = vst [vmem:[#allocation11] sm:$0xff] %v1081
    %1112 = vst [vmem:[#allocation11 + $0x8] sm:$0xff] %v1084
    %1113 = vst [vmem:[#allocation11 + $0x10] sm:$0xff] %v1089
    %1114 = vst [vmem:[#allocation11 + $0x18] sm:$0xff] %v1092
    %1115 = vst [vmem:[#allocation11 + $0x20] sm:$0xff] %v1097
    %1116 = vst [vmem:[#allocation11 + $0x28] sm:$0xff] %v1100
    %1117 = vst [vmem:[#allocation11 + $0x30] sm:$0xff] %v1105
    %1118 = vst [vmem:[#allocation11 + $0x38] sm:$0xff] %v1108
    // Predicated region
    $region42: #{tpu_custom_call.1} parent=1 // pred_check
      _
    $region43: #{tpu_custom_call.1} parent=1 // pred_check_branch
      %1120 = sbr.rel (0) target = $region45
    $region44: #{tpu_custom_call.1} parent=1 // pred_region
      %s1122 = ssub.s32 1024, 1024
      %1123 = vsyncadd [#allocation4], %s1122
      %s1124 = sshll.u32 [#allocation11], 4
      %s1125 = int_to_ptr.vmem [resolvable:$true] %s1124
      %1130 = dma.vmem_to_hbm [thread:$0]  %s1125, 1024, %s5, [#allocation4], 128, 128, 8
    $region45: #{tpu_custom_call.1} parent=1 // pred_fallthru
      _
    // Predicated region
    $region46: #{tpu_custom_call.1} parent=1 // pred_check
      _
    $region47: #{tpu_custom_call.1} parent=1 // pred_check_branch
      %1132 = sbr.rel (0) target = $region49
    $region48: #{tpu_custom_call.1} parent=1 // pred_region
      %1133 = dma.done [#allocation4], 1024
    $region49: #{tpu_custom_call.1} parent=1 // pred_fallthru
      _
    %1134 = vsyncpa [#allocation3], 1
    %1135 = vsyncpa [#allocation6], 1
    %1136 = vsyncpa [#allocation9], 1
    %1137 = vsyncpa [#allocation4], 1

</llo_original>
